<compile_context>
chip_gen: v5e
topology: v5e:2x2
jax: 0.10.0
libtpu: 0.0.40
codegen_flags: <defaults>
</compile_context>

<pallas_src>
import functools

import numpy as np
import jax
import jax.numpy as jnp
from jax.experimental import pallas as pl
from jax.experimental.pallas import tpu as pltpu

P = 128            # lane-padded feature width (all merged layer widths <= 127)
BIAS_LANE = P - 1  # reserved lane: bias row in weights / constant-1 activation


def _round_up(x, m):
    return ((x + m - 1) // m) * m


# ----------------------------------------------------------------------------
# Fused Pallas kernel: lane-pad z, then the whole merged Linear(+ReLU) chain.
# ----------------------------------------------------------------------------
def decoder_fused_kernel(z_ref, w_ref, o_ref, h_ref, *, n_layers, z_dim):
    tm = h_ref.shape[0]
    # Lane-pad z in-kernel: lanes [0, z_dim) = z, lane 127 = 1 (ones lane that
    # picks up the bias row in every matmul), everything else 0.
    h_ref[...] = jnp.zeros_like(h_ref)
    h_ref[:, :z_dim] = z_ref[...].astype(jnp.float32)
    h_ref[:, BIAS_LANE:P] = jnp.ones((tm, 1), jnp.float32)
    h = h_ref[...]
    # Merged chain: common Linear+ReLU layers, then the merged head layers.
    # Only the very last layer has no ReLU.  Biases ride in weight row 127.
    for l in range(n_layers):                               # static unroll
        h = jnp.dot(h.astype(jnp.bfloat16), w_ref[l],
                    preferred_element_type=jnp.float32)
        if l < n_layers - 1:
            h = jnp.maximum(h, 0.0)
    o_ref[...] = h.astype(o_ref.dtype)


def fused_decoder_call(z_in, w_stack, *, z_dim, tm):
    b_pad = int(z_in.shape[0])
    n_layers = int(w_stack.shape[0])
    assert b_pad % tm == 0
    kernel = functools.partial(decoder_fused_kernel,
                               n_layers=n_layers, z_dim=z_dim)
    return pl.pallas_call(
        kernel,
        out_shape=jax.ShapeDtypeStruct((b_pad, P), jnp.float32),
        grid_spec=pltpu.PrefetchScalarGridSpec(
            num_scalar_prefetch=0,
            grid=(b_pad // tm,),
            in_specs=[
                # z at its true feature width; batch tiled over the grid.
                pl.BlockSpec((tm, z_dim), lambda i: (i, 0)),
                # merged weight stack: constant index_map -> VMEM-resident.
                pl.BlockSpec((n_layers, P, P), lambda i: (0, 0, 0)),
            ],
            out_specs=pl.BlockSpec((tm, P), lambda i: (i, 0)),
            scratch_shapes=[pltpu.VMEM((tm, P), jnp.float32)]),
        compiler_params=pltpu.CompilerParams(
            dimension_semantics=("parallel",)),   # shards tiles across v7x TCs
    )(z_in, w_stack)


# ----------------------------------------------------------------------------
# Parameter construction (deterministic, in-script)
# ----------------------------------------------------------------------------
def _init_linear(key, d_in, d_out):
    key, kw, kb = jax.random.split(key, 3)
    w = jax.random.normal(kw, (d_in, d_out), jnp.float32) / np.sqrt(d_in)
    b = jax.random.normal(kb, (d_out,), jnp.float32) * 0.01
    return key, w, b


def _pack_merged_stack(z_dim, common_raw, head_raw):
    """Pack common chain + all head chains into one (L,128,128) weight stack.

    Row 127 of every layer is the bias row; W[l,127,127]=1 propagates the
    constant-one activation lane.  Head layer 0 is concatenated along N
    (shared input = common hidden); deeper head layers are block-diagonal.
    Returns the stack plus per-head (offset, dim) into the final output lanes.
    """
    assert z_dim <= BIAS_LANE
    n_heads = len(head_raw)
    lh = len(head_raw[0])
    assert all(len(c) == lh for c in head_raw), \
        "head merging requires equal per-head layer counts"
    lc = len(common_raw)
    n_layers = lc + lh
    w_stack = np.zeros((n_layers, P, P), np.float32)

    def place(l, w_np, b_np, i0, o0):
        di, do = w_np.shape
        assert i0 + di <= BIAS_LANE and o0 + do <= BIAS_LANE, \
            "merged layer width exceeds 127 lanes"
        w_stack[l, i0:i0 + di, o0:o0 + do] = w_np
        w_stack[l, BIAS_LANE, o0:o0 + do] = b_np

    for l, (wl, bl) in enumerate(common_raw):
        place(l, np.asarray(wl), np.asarray(bl), 0, 0)

    out_dims = [[int(head_raw[k][l][0].shape[1]) for k in range(n_heads)]
                for l in range(lh)]
    out_off = [np.concatenate(([0], np.cumsum(d)[:-1])).astype(int)
               for d in out_dims]
    for l in range(lh):
        for k in range(n_heads):
            wl, bl = head_raw[k][l]
            i0 = 0 if l == 0 else int(out_off[l - 1][k])
            o0 = int(out_off[l][k])
            place(lc + l, np.asarray(wl), np.asarray(bl), i0, o0)

    # ones-lane propagation (harmless on the last layer, which we slice).
    w_stack[:, BIAS_LANE, BIAS_LANE] = 1.0
    # Invariant guard: padded lanes must stay exactly zero through ReLU;
    # in particular no real weight may spill into the reserved bias lane.
    assert np.all(w_stack[:, :BIAS_LANE, BIAS_LANE] == 0.0)

    head_off = [int(out_off[lh - 1][k]) for k in range(n_heads)]
    head_dim = [int(out_dims[lh - 1][k]) for k in range(n_heads)]
    return w_stack, head_off, head_dim


def build_decoder_params(z_dim, hidden_dims_dec_common, hidden_dims_dec_last,
                         input_size, seed=0):
    # replicate hidden_dims_dec_last per input (as the module does)
    if not isinstance(hidden_dims_dec_last[0], list):
        hidden_dims_dec_last = [list(hidden_dims_dec_last) for _ in input_size]

    key = jax.random.PRNGKey(seed)

    common_dims = [z_dim] + list(hidden_dims_dec_common)
    common_raw = []
    for l in range(len(common_dims) - 1):
        key, w, b = _init_linear(key, common_dims[l], common_dims[l + 1])
        common_raw.append((w, b))

    head_raw = []
    for k, out_dim in enumerate(input_size):
        dims_k = [hidden_dims_dec_common[-1]] + hidden_dims_dec_last[k] + [out_dim]
        chain = []
        for l in range(len(dims_k) - 1):
            key, w, b = _init_linear(key, dims_k[l], dims_k[l + 1])
            chain.append((w, b))
        head_raw.append(chain)

    w_stack, head_off, head_dim = _pack_merged_stack(z_dim, common_raw, head_raw)

    return dict(
        w=jnp.asarray(w_stack).astype(jnp.bfloat16),   # bf16 weights, f32 acc
        z_dim=z_dim,
        head_off=head_off, head_dim=head_dim,
        common_raw=common_raw, head_raw=head_raw)


# ----------------------------------------------------------------------------
# Decoder forward (glue in plain JAX, all compute in the single fused kernel)
# ----------------------------------------------------------------------------
def decoder_forward(z, params, *, tm=None):
    batch, z_dim = z.shape
    if z_dim != params["z_dim"]:
        raise ValueError("z_dim mismatch with built parameters")
    if tm is None:
        # Small batches: a single 8-row tile.  Larger batches: up to 256 rows
        # per tile to fill the 256-row MXU (v6e/v7x) and use both v7x cores.
        tm = 8 if batch <= 8 else min(256, _round_up(batch, 8))
    b_pad = _round_up(batch, tm)
    z_in = z.astype(jnp.float32)
    if b_pad != batch:
        z_in = jnp.zeros((b_pad, z_dim), jnp.float32).at[:batch].set(z_in)

    out_pad = fused_decoder_call(z_in, params["w"], z_dim=z_dim, tm=tm)

    input_reconstructed = [
        out_pad[:batch, off:off + dim]
        for off, dim in zip(params["head_off"], params["head_dim"])
    ]
    return input_reconstructed, None   # has_side = False


# ----------------------------------------------------------------------------
# Pure-JAX reference (unpadded, same bf16-weight / f32-accumulate precision)
# ----------------------------------------------------------------------------
def reference_forward(z, params):
    def lin(x, w, b):
        return (jnp.dot(x.astype(jnp.bfloat16), w.astype(jnp.bfloat16),
                        preferred_element_type=jnp.float32)
                + b.astype(jnp.bfloat16).astype(jnp.float32))

    h = z.astype(jnp.float32)
    for (w, b) in params["common_raw"]:
        h = jnp.maximum(lin(h, w, b), 0.0)
    outs = []
    for chain in params["head_raw"]:
        x = h
        n = len(chain)
        for l, (w, b) in enumerate(chain):
            x = lin(x, w, b)
            if l < n - 1:
                x = jnp.maximum(x, 0.0)
        outs.append(x)
    return outs, None


# ----------------------------------------------------------------------------
if __name__ == "__main__":
    # Module config (small, "linear" layers_independent_types, no side data)
    input_size = [20, 12]
    z_dim = 8
    hidden_dims_dec_common = [16, 32]
    hidden_dims_dec_last = [24, 16]
    output_types_input = ["G", "G"]   # Gaussian heads -> plain Linear output
    batch = 2

    params = build_decoder_params(z_dim, hidden_dims_dec_common,
                                  hidden_dims_dec_last, input_size, seed=0)

    z = jax.random.normal(jax.random.PRNGKey(0), (batch, z_dim), jnp.float32)

    recon, side = decoder_forward(z, params)
    recon = [jax.block_until_ready(r) for r in recon]
    assert side is None

    ref, _ = reference_forward(z, params)
    for got, exp, d in zip(recon, ref, input_size):
        assert got.shape == (batch, d)
        np.testing.assert_allclose(np.asarray(got), np.asarray(exp),
                                   rtol=1e-3, atol=1e-3)

    print("KERNEL_OK")
</pallas_src>

<mosaic_0001>
module attributes {stable_mosaic.version = 11 : i64} {
  func.func @decoder_fused_kernel(%arg0: i32, %arg1: memref<8x8xf32, #tpu.memory_space<vmem>>, %arg2: memref<5x128x128xbf16, #tpu.memory_space<vmem>>, %arg3: memref<8x128xf32, #tpu.memory_space<vmem>>, %arg4: memref<8x128xf32, #tpu.memory_space<vmem>>) attributes {dimension_semantics = [#tpu.dimension_semantics<parallel>], iteration_bounds = array<i64: 1>, scalar_prefetch = 0 : i64, scratch_operands = 1 : i64, tpu.core_type = #tpu.core_type<tc>, window_params = [{transform_indices = @transform_0, window_bounds = array<i64: 8, 8>}, {pipeline_mode = #tpu.pipeline_mode<synchronous>, transform_indices = @transform_1, window_bounds = array<i64: 5, 128, 128>}, {transform_indices = @transform_2, window_bounds = array<i64: 8, 128>}]} {
    %cst = arith.constant 0.000000e+00 : f32
    %0 = vector.broadcast %cst : f32 to vector<8x128xf32>
    %c0 = arith.constant 0 : index
    %c0_0 = arith.constant 0 : index
    %1 = vector.load %arg4[%c0, %c0_0] : memref<8x128xf32, #tpu.memory_space<vmem>>, vector<8x128xf32>
    tpu.vector_store %arg4[%c0, %c0_0], %0 {strides = array<i32>} : memref<8x128xf32, #tpu.memory_space<vmem>>, vector<8x128xf32>,
    %c0_1 = arith.constant 0 : index
    %c0_2 = arith.constant 0 : index
    %2 = vector.load %arg1[%c0_1, %c0_2] : memref<8x8xf32, #tpu.memory_space<vmem>>, vector<8x8xf32>
    %c0_3 = arith.constant 0 : index
    %c0_4 = arith.constant 0 : index
    %3 = vector.load %arg4[%c0_3, %c0_4] : memref<8x128xf32, #tpu.memory_space<vmem>>, vector<8x8xf32>
    tpu.vector_store %arg4[%c0_3, %c0_4], %2 {strides = array<i32>} : memref<8x128xf32, #tpu.memory_space<vmem>>, vector<8x8xf32>,
    %cst_5 = arith.constant 1.000000e+00 : f32
    %4 = vector.broadcast %cst_5 : f32 to vector<8x1xf32>
    %c0_6 = arith.constant 0 : index
    %c127 = arith.constant 127 : index
    %5 = vector.load %arg4[%c0_6, %c127] : memref<8x128xf32, #tpu.memory_space<vmem>>, vector<8x1xf32>
    tpu.vector_store %arg4[%c0_6, %c127], %4 {strides = array<i32>} : memref<8x128xf32, #tpu.memory_space<vmem>>, vector<8x1xf32>,
    %c0_7 = arith.constant 0 : index
    %c0_8 = arith.constant 0 : index
    %6 = vector.load %arg4[%c0_7, %c0_8] : memref<8x128xf32, #tpu.memory_space<vmem>>, vector<8x128xf32>
    %7 = arith.truncf %6 : vector<8x128xf32> to vector<8x128xbf16>
    %c0_9 = arith.constant 0 : index
    %c0_10 = arith.constant 0 : index
    %c0_11 = arith.constant 0 : index
    %8 = vector.load %arg2[%c0_9, %c0_10, %c0_11] : memref<5x128x128xbf16, #tpu.memory_space<vmem>>, vector<1x128x128xbf16>
    %9 = vector.shape_cast %8 : vector<1x128x128xbf16> to vector<128x128xbf16>
    %cst_12 = arith.constant dense<0.000000e+00> : vector<8x128xf32>
    %10 = tpu.matmul %7, %9, %cst_12 {dimension_numbers = #tpu.dot_dimension_numbers<[1], [0], [0], [1], [0, 0, 1, 1], [], []>} : vector<8x128xbf16>, vector<128x128xbf16>, vector<8x128xf32> -> vector<8x128xf32>
    %cst_13 = arith.constant 0.000000e+00 : f32
    %11 = vector.broadcast %cst_13 : f32 to vector<8x128xf32>
    %12 = arith.maximumf %10, %11 : vector<8x128xf32>
    %13 = arith.truncf %12 : vector<8x128xf32> to vector<8x128xbf16>
    %c1 = arith.constant 1 : index
    %c0_14 = arith.constant 0 : index
    %c0_15 = arith.constant 0 : index
    %14 = vector.load %arg2[%c1, %c0_14, %c0_15] : memref<5x128x128xbf16, #tpu.memory_space<vmem>>, vector<1x128x128xbf16>
    %15 = vector.shape_cast %14 : vector<1x128x128xbf16> to vector<128x128xbf16>
    %cst_16 = arith.constant dense<0.000000e+00> : vector<8x128xf32>
    %16 = tpu.matmul %13, %15, %cst_16 {dimension_numbers = #tpu.dot_dimension_numbers<[1], [0], [0], [1], [0, 0, 1, 1], [], []>} : vector<8x128xbf16>, vector<128x128xbf16>, vector<8x128xf32> -> vector<8x128xf32>
    %cst_17 = arith.constant 0.000000e+00 : f32
    %17 = vector.broadcast %cst_17 : f32 to vector<8x128xf32>
    %18 = arith.maximumf %16, %17 : vector<8x128xf32>
    %19 = arith.truncf %18 : vector<8x128xf32> to vector<8x128xbf16>
    %c2 = arith.constant 2 : index
    %c0_18 = arith.constant 0 : index
    %c0_19 = arith.constant 0 : index
    %20 = vector.load %arg2[%c2, %c0_18, %c0_19] : memref<5x128x128xbf16, #tpu.memory_space<vmem>>, vector<1x128x128xbf16>
    %21 = vector.shape_cast %20 : vector<1x128x128xbf16> to vector<128x128xbf16>
    %cst_20 = arith.constant dense<0.000000e+00> : vector<8x128xf32>
    %22 = tpu.matmul %19, %21, %cst_20 {dimension_numbers = #tpu.dot_dimension_numbers<[1], [0], [0], [1], [0, 0, 1, 1], [], []>} : vector<8x128xbf16>, vector<128x128xbf16>, vector<8x128xf32> -> vector<8x128xf32>
    %cst_21 = arith.constant 0.000000e+00 : f32
    %23 = vector.broadcast %cst_21 : f32 to vector<8x128xf32>
    %24 = arith.maximumf %22, %23 : vector<8x128xf32>
    %25 = arith.truncf %24 : vector<8x128xf32> to vector<8x128xbf16>
    %c3 = arith.constant 3 : index
    %c0_22 = arith.constant 0 : index
    %c0_23 = arith.constant 0 : index
    %26 = vector.load %arg2[%c3, %c0_22, %c0_23] : memref<5x128x128xbf16, #tpu.memory_space<vmem>>, vector<1x128x128xbf16>
    %27 = vector.shape_cast %26 : vector<1x128x128xbf16> to vector<128x128xbf16>
    %cst_24 = arith.constant dense<0.000000e+00> : vector<8x128xf32>
    %28 = tpu.matmul %25, %27, %cst_24 {dimension_numbers = #tpu.dot_dimension_numbers<[1], [0], [0], [1], [0, 0, 1, 1], [], []>} : vector<8x128xbf16>, vector<128x128xbf16>, vector<8x128xf32> -> vector<8x128xf32>
    %cst_25 = arith.constant 0.000000e+00 : f32
    %29 = vector.broadcast %cst_25 : f32 to vector<8x128xf32>
    %30 = arith.maximumf %28, %29 : vector<8x128xf32>
    %31 = arith.truncf %30 : vector<8x128xf32> to vector<8x128xbf16>
    %c4 = arith.constant 4 : index
    %c0_26 = arith.constant 0 : index
    %c0_27 = arith.constant 0 : index
    %32 = vector.load %arg2[%c4, %c0_26, %c0_27] : memref<5x128x128xbf16, #tpu.memory_space<vmem>>, vector<1x128x128xbf16>
    %33 = vector.shape_cast %32 : vector<1x128x128xbf16> to vector<128x128xbf16>
    %cst_28 = arith.constant dense<0.000000e+00> : vector<8x128xf32>
    %34 = tpu.matmul %31, %33, %cst_28 {dimension_numbers = #tpu.dot_dimension_numbers<[1], [0], [0], [1], [0, 0, 1, 1], [], []>} : vector<8x128xbf16>, vector<128x128xbf16>, vector<8x128xf32> -> vector<8x128xf32>
    %c0_29 = arith.constant 0 : index
    %c0_30 = arith.constant 0 : index
    %35 = vector.load %arg3[%c0_29, %c0_30] : memref<8x128xf32, #tpu.memory_space<vmem>>, vector<8x128xf32>
    tpu.vector_store %arg3[%c0_29, %c0_30], %34 {strides = array<i32>} : memref<8x128xf32, #tpu.memory_space<vmem>>, vector<8x128xf32>,
    return
  }
  func.func @transform_0(%arg0: i32) -> (i32, i32) {
    %c0_i32 = arith.constant 0 : i32
    %c0_i32_0 = arith.constant 0 : i32
    return %arg0, %c0_i32 : i32, i32
  }
  func.func @transform_1(%arg0: i32) -> (i32, i32, i32) {
    %c0_i32 = arith.constant 0 : i32
    %c0_i32_0 = arith.constant 0 : i32
    %c0_i32_1 = arith.constant 0 : i32
    %c0_i32_2 = arith.constant 0 : i32
    return %c0_i32, %c0_i32_0, %c0_i32_1 : i32, i32, i32
  }
  func.func @transform_2(%arg0: i32) -> (i32, i32) {
    %c0_i32 = arith.constant 0 : i32
    %c0_i32_0 = arith.constant 0 : i32
    return %arg0, %c0_i32 : i32, i32
  }
}

</mosaic_0001>

<llo_original>
// kernel: tpu_custom_call.1
$region0: #{tpu_custom_call.1}
  #allocation0 [shape = 'u32[]', space=smem, size = 0x4, offset = 0x4, fixed_abs, tag = 'smem constant byte address 0x4 - core index']
  #allocation1 [shape = 'u32[72,128]{1,0:T(1,128)}', space=vmem, size = 0x9000, scoped, tag = 'internal scratch']
  #allocation2 [shape = 'f32[8,128]{1,0:T(8,128)}', space=vmem, size = 0x1000, scoped, tag = 'scratch operand']
  %s0 = inlined_call_operand.hbm [shape: f32[8,8], index: 0, kind: input, shape index: {}]
  %s1 = inlined_call_operand.hbm [shape: bf16[5,128,128], index: 1, kind: input, shape index: {}]
  %s2 = inlined_call_operand.hbm [shape: f32[8,128], index: 2, kind: output, shape index: {}]
  %s3 = sld [smem:[#allocation0]]
  $region26: #{tpu_custom_call.1} parent=0
    _
  %s5 = ssub.s32 1, %s3
  %s6 = scalar_select 0, %s5, %s3
  $region1: #{tpu_custom_call.1} parent=0
    #allocation3 [shape = 'u8[4096]{0}', space=vmem, size = 0x1000, scoped, tag = 'input window, operand 0, single buffered']
    #allocation4 [shape = 's32[1]{0}', space=sflag, size = 0x4, scoped, tag = 'scoped memory for tpu_custom_call.1']
    #allocation5 [shape = 's32[1]{0}', space=sflag, size = 0x4, scoped, tag = 'scoped memory for tpu_custom_call.1']
    #allocation6 [shape = 'u8[163840]{0}', space=vmem, size = 0x28000, scoped, tag = 'input window, operand 1, single buffered']
    #allocation7 [shape = 's32[1]{0}', space=sflag, size = 0x4, scoped, tag = 'scoped memory for tpu_custom_call.1']
    #allocation8 [shape = 'u8[4096]{0}', space=vmem, size = 0x1000, scoped, tag = 'output window, operand 0, single buffered']
    %7 = vsyncpa [#allocation4], 0
    %8 = vsyncpa [#allocation7], 0
    %9 = vsyncpa [#allocation5], 0
    // Predicated region
    $region2: #{tpu_custom_call.1} parent=1 // pred_check
      _
    $region3: #{tpu_custom_call.1} parent=1 // pred_check_branch
      %11 = sbr.rel (0) target = $region5
    $region4: #{tpu_custom_call.1} parent=1 // pred_region
      %13 = vsyncadd [#allocation4], 0
      %s15 = sshll.u32 %s0, 4
      %s16 = int_to_ptr.hbm [resolvable:$true] %s15
      %s17 = sshll.u32 [#allocation3], 4
      %s18 = int_to_ptr.vmem [resolvable:$true] %s17
      %20 = dma.hbm_to_vmem [thread:$0]  %s16, 128, %s18, [#allocation4]
    $region5: #{tpu_custom_call.1} parent=1 // pred_fallthru
      _
    // Predicated region
    $region6: #{tpu_custom_call.1} parent=1 // pred_check
      _
    $region7: #{tpu_custom_call.1} parent=1 // pred_check_branch
      %22 = sbr.rel (0) target = $region9
    $region8: #{tpu_custom_call.1} parent=1 // pred_region
      %24 = vsyncadd [#allocation7], 0
      %s25 = sshll.u32 %s1, 4
      %s26 = int_to_ptr.hbm [resolvable:$true] %s25
      %s27 = sshll.u32 [#allocation6], 4
      %s28 = int_to_ptr.vmem [resolvable:$true] %s27
      %33 = dma.hbm_to_vmem [thread:$0]  %s26, 5120, %s28, [#allocation7], 64, 64, 4
    $region9: #{tpu_custom_call.1} parent=1 // pred_fallthru
      _
    // Predicated region
    $region10: #{tpu_custom_call.1} parent=1 // pred_check
      _
    $region11: #{tpu_custom_call.1} parent=1 // pred_check_branch
      %35 = sbr.rel (0) target = $region13
    $region12: #{tpu_custom_call.1} parent=1 // pred_region
      %37 = dma.done [#allocation4], 128
    $region13: #{tpu_custom_call.1} parent=1 // pred_fallthru
      _
    // Predicated region
    $region14: #{tpu_custom_call.1} parent=1 // pred_check
      _
    $region15: #{tpu_custom_call.1} parent=1 // pred_check_branch
      %39 = sbr.rel (0) target = $region17
    $region16: #{tpu_custom_call.1} parent=1 // pred_region
      %41 = dma.done [#allocation7], 5120
    $region17: #{tpu_custom_call.1} parent=1 // pred_fallthru
      _
    %42 = vst [vmem:[#allocation2] sm:$0xff] 0.0
    %v43 = vld [vmem:[#allocation3] sm:$0xff]
    %vm44 = vcmask 64512
    %45 = vst.msk [vmem:[#allocation2] sm:$0xff] %vm44, %v43
    %vm46 = vcmask 1048568
    %47 = vst.msk [vmem:[#allocation2] sm:$0xff] %vm46, 1.0
    %v48 = vld [vmem:[#allocation2] sm:$0xff]
    %v49 = vpack.c.bf16 %v48, %v48
    %v50 = vld [vmem:[#allocation6] sm:$0xf]
    %v51 = vld [vmem:[#allocation6 + $0x4] sm:$0xf]
    %v52 = vld [vmem:[#allocation6 + $0x8] sm:$0xf]
    %v53 = vld [vmem:[#allocation6 + $0xc] sm:$0xf]
    %v54 = vld [vmem:[#allocation6 + $0x10] sm:$0xf]
    %v55 = vld [vmem:[#allocation6 + $0x14] sm:$0xf]
    %v56 = vld [vmem:[#allocation6 + $0x18] sm:$0xf]
    %v57 = vld [vmem:[#allocation6 + $0x1c] sm:$0xf]
    %v58 = vld [vmem:[#allocation6 + $0x20] sm:$0xf]
    %v59 = vld [vmem:[#allocation6 + $0x24] sm:$0xf]
    %v60 = vld [vmem:[#allocation6 + $0x28] sm:$0xf]
    %v61 = vld [vmem:[#allocation6 + $0x2c] sm:$0xf]
    %v62 = vld [vmem:[#allocation6 + $0x30] sm:$0xf]
    %v63 = vld [vmem:[#allocation6 + $0x34] sm:$0xf]
    %v64 = vld [vmem:[#allocation6 + $0x38] sm:$0xf]
    %v65 = vld [vmem:[#allocation6 + $0x3c] sm:$0xf]
    %v82 = vunpack.c.l.b16 %v50
    %v83 = vunpack.c.l.b16 %v51
    %v84 = vunpack.c.l.b16 %v52
    %v85 = vunpack.c.l.b16 %v53
    %v86 = vunpack.c.l.b16 %v54
    %v87 = vunpack.c.l.b16 %v55
    %v88 = vunpack.c.l.b16 %v56
    %v89 = vunpack.c.l.b16 %v57
    %v90 = vunpack.c.l.b16 %v58
    %v91 = vunpack.c.l.b16 %v59
    %v92 = vunpack.c.l.b16 %v60
    %v93 = vunpack.c.l.b16 %v61
    %v94 = vunpack.c.l.b16 %v62
    %v95 = vunpack.c.l.b16 %v63
    %v96 = vunpack.c.l.b16 %v64
    %v97 = vunpack.c.l.b16 %v65
    %v98 = vpack.c.b16 %v83, %v82
    %v99 = vpack.c.b16 %v85, %v84
    %v100 = vpack.c.b16 %v87, %v86
    %v101 = vpack.c.b16 %v89, %v88
    %v102 = vpack.c.b16 %v91, %v90
    %v103 = vpack.c.b16 %v93, %v92
    %v104 = vpack.c.b16 %v95, %v94
    %v105 = vpack.c.b16 %v97, %v96
    %114 = vmatpush.bf16.msra.mxu0 %v105
    %115 = vmatpush.bf16.msra.mxu0 %v104
    %116 = vmatpush.bf16.msra.mxu0 %v103
    %117 = vmatpush.bf16.msra.mxu0 %v102
    %118 = vmatpush.bf16.msra.mxu0 %v101
    %119 = vmatpush.bf16.msra.mxu0 %v100
    %120 = vmatpush.bf16.msra.mxu0 %v99
    %121 = vmatpush.bf16.msra.mxu0 %v98
    %122 = vmatmul.bf16.gmra.mxu0 %v49
    %v123 = vpop.f32.mrf.mxu0
    %v124 = vadd.f32 0.0, %v123
    %v125 = vpop.f32.mrf.mxu0
    %126 = vdwg.mxu0
    %v127 = vmax.f32 %v124, 0.0
    %v128 = vpack.c.bf16 %v127, %v127
    %s129 = scalar_lea.vmem [#allocation6], 64
    %v130 = vld [vmem:[%s129] sm:$0xf]
    %v131 = vld [vmem:[%s129 + $0x4] sm:$0xf]
    %v132 = vld [vmem:[%s129 + $0x8] sm:$0xf]
    %v133 = vld [vmem:[%s129 + $0xc] sm:$0xf]
    %v134 = vld [vmem:[%s129 + $0x10] sm:$0xf]
    %v135 = vld [vmem:[%s129 + $0x14] sm:$0xf]
    %v136 = vld [vmem:[%s129 + $0x18] sm:$0xf]
    %v137 = vld [vmem:[%s129 + $0x1c] sm:$0xf]
    %v138 = vld [vmem:[%s129 + $0x20] sm:$0xf]
    %v139 = vld [vmem:[%s129 + $0x24] sm:$0xf]
    %v140 = vld [vmem:[%s129 + $0x28] sm:$0xf]
    %v141 = vld [vmem:[%s129 + $0x2c] sm:$0xf]
    %v142 = vld [vmem:[%s129 + $0x30] sm:$0xf]
    %v143 = vld [vmem:[%s129 + $0x34] sm:$0xf]
    %v144 = vld [vmem:[%s129 + $0x38] sm:$0xf]
    %v145 = vld [vmem:[%s129 + $0x3c] sm:$0xf]
    %v162 = vunpack.c.l.b16 %v130
    %v163 = vunpack.c.l.b16 %v131
    %v164 = vunpack.c.l.b16 %v132
    %v165 = vunpack.c.l.b16 %v133
    %v166 = vunpack.c.l.b16 %v134
    %v167 = vunpack.c.l.b16 %v135
    %v168 = vunpack.c.l.b16 %v136
    %v169 = vunpack.c.l.b16 %v137
    %v170 = vunpack.c.l.b16 %v138
    %v171 = vunpack.c.l.b16 %v139
    %v172 = vunpack.c.l.b16 %v140
    %v173 = vunpack.c.l.b16 %v141
    %v174 = vunpack.c.l.b16 %v142
    %v175 = vunpack.c.l.b16 %v143
    %v176 = vunpack.c.l.b16 %v144
    %v177 = vunpack.c.l.b16 %v145
    %v178 = vpack.c.b16 %v163, %v162
    %v179 = vpack.c.b16 %v165, %v164
    %v180 = vpack.c.b16 %v167, %v166
    %v181 = vpack.c.b16 %v169, %v168
    %v182 = vpack.c.b16 %v171, %v170
    %v183 = vpack.c.b16 %v173, %v172
    %v184 = vpack.c.b16 %v175, %v174
    %v185 = vpack.c.b16 %v177, %v176
    %194 = vmatpush.bf16.msra.mxu0 %v185
    %195 = vmatpush.bf16.msra.mxu0 %v184
    %196 = vmatpush.bf16.msra.mxu0 %v183
    %197 = vmatpush.bf16.msra.mxu0 %v182
    %198 = vmatpush.bf16.msra.mxu0 %v181
    %199 = vmatpush.bf16.msra.mxu0 %v180
    %200 = vmatpush.bf16.msra.mxu0 %v179
    %201 = vmatpush.bf16.msra.mxu0 %v178
    %202 = vmatmul.bf16.gmra.mxu0 %v128
    %v203 = vpop.f32.mrf.mxu0
    %v204 = vadd.f32 0.0, %v203
    %v205 = vpop.f32.mrf.mxu0
    %206 = vdwg.mxu0
    %v207 = vmax.f32 %v204, 0.0
    %v208 = vpack.c.bf16 %v207, %v207
    %s209 = scalar_lea.vmem [#allocation6], 128
    %v210 = vld [vmem:[%s209] sm:$0xf]
    %v211 = vld [vmem:[%s209 + $0x4] sm:$0xf]
    %v212 = vld [vmem:[%s209 + $0x8] sm:$0xf]
    %v213 = vld [vmem:[%s209 + $0xc] sm:$0xf]
    %v214 = vld [vmem:[%s209 + $0x10] sm:$0xf]
    %v215 = vld [vmem:[%s209 + $0x14] sm:$0xf]
    %v216 = vld [vmem:[%s209 + $0x18] sm:$0xf]
    %v217 = vld [vmem:[%s209 + $0x1c] sm:$0xf]
    %v218 = vld [vmem:[%s209 + $0x20] sm:$0xf]
    %v219 = vld [vmem:[%s209 + $0x24] sm:$0xf]
    %v220 = vld [vmem:[%s209 + $0x28] sm:$0xf]
    %v221 = vld [vmem:[%s209 + $0x2c] sm:$0xf]
    %v222 = vld [vmem:[%s209 + $0x30] sm:$0xf]
    %v223 = vld [vmem:[%s209 + $0x34] sm:$0xf]
    %v224 = vld [vmem:[%s209 + $0x38] sm:$0xf]
    %v225 = vld [vmem:[%s209 + $0x3c] sm:$0xf]
    %v242 = vunpack.c.l.b16 %v210
    %v243 = vunpack.c.l.b16 %v211
    %v244 = vunpack.c.l.b16 %v212
    %v245 = vunpack.c.l.b16 %v213
    %v246 = vunpack.c.l.b16 %v214
    %v247 = vunpack.c.l.b16 %v215
    %v248 = vunpack.c.l.b16 %v216
    %v249 = vunpack.c.l.b16 %v217
    %v250 = vunpack.c.l.b16 %v218
    %v251 = vunpack.c.l.b16 %v219
    %v252 = vunpack.c.l.b16 %v220
    %v253 = vunpack.c.l.b16 %v221
    %v254 = vunpack.c.l.b16 %v222
    %v255 = vunpack.c.l.b16 %v223
    %v256 = vunpack.c.l.b16 %v224
    %v257 = vunpack.c.l.b16 %v225
    %v258 = vpack.c.b16 %v243, %v242
    %v259 = vpack.c.b16 %v245, %v244
    %v260 = vpack.c.b16 %v247, %v246
    %v261 = vpack.c.b16 %v249, %v248
    %v262 = vpack.c.b16 %v251, %v250
    %v263 = vpack.c.b16 %v253, %v252
    %v264 = vpack.c.b16 %v255, %v254
    %v265 = vpack.c.b16 %v257, %v256
    %274 = vmatpush.bf16.msra.mxu0 %v265
    %275 = vmatpush.bf16.msra.mxu0 %v264
    %276 = vmatpush.bf16.msra.mxu0 %v263
    %277 = vmatpush.bf16.msra.mxu0 %v262
    %278 = vmatpush.bf16.msra.mxu0 %v261
    %279 = vmatpush.bf16.msra.mxu0 %v260
    %280 = vmatpush.bf16.msra.mxu0 %v259
    %281 = vmatpush.bf16.msra.mxu0 %v258
    %282 = vmatmul.bf16.gmra.mxu0 %v208
    %v283 = vpop.f32.mrf.mxu0
    %v284 = vadd.f32 0.0, %v283
    %v285 = vpop.f32.mrf.mxu0
    %286 = vdwg.mxu0
    %v287 = vmax.f32 %v284, 0.0
    %v288 = vpack.c.bf16 %v287, %v287
    %s289 = scalar_lea.vmem [#allocation6], 192
    %v290 = vld [vmem:[%s289] sm:$0xf]
    %v291 = vld [vmem:[%s289 + $0x4] sm:$0xf]
    %v292 = vld [vmem:[%s289 + $0x8] sm:$0xf]
    %v293 = vld [vmem:[%s289 + $0xc] sm:$0xf]
    %v294 = vld [vmem:[%s289 + $0x10] sm:$0xf]
    %v295 = vld [vmem:[%s289 + $0x14] sm:$0xf]
    %v296 = vld [vmem:[%s289 + $0x18] sm:$0xf]
    %v297 = vld [vmem:[%s289 + $0x1c] sm:$0xf]
    %v298 = vld [vmem:[%s289 + $0x20] sm:$0xf]
    %v299 = vld [vmem:[%s289 + $0x24] sm:$0xf]
    %v300 = vld [vmem:[%s289 + $0x28] sm:$0xf]
    %v301 = vld [vmem:[%s289 + $0x2c] sm:$0xf]
    %v302 = vld [vmem:[%s289 + $0x30] sm:$0xf]
    %v303 = vld [vmem:[%s289 + $0x34] sm:$0xf]
    %v304 = vld [vmem:[%s289 + $0x38] sm:$0xf]
    %v305 = vld [vmem:[%s289 + $0x3c] sm:$0xf]
    %v322 = vunpack.c.l.b16 %v290
    %v323 = vunpack.c.l.b16 %v291
    %v324 = vunpack.c.l.b16 %v292
    %v325 = vunpack.c.l.b16 %v293
    %v326 = vunpack.c.l.b16 %v294
    %v327 = vunpack.c.l.b16 %v295
    %v328 = vunpack.c.l.b16 %v296
    %v329 = vunpack.c.l.b16 %v297
    %v330 = vunpack.c.l.b16 %v298
    %v331 = vunpack.c.l.b16 %v299
    %v332 = vunpack.c.l.b16 %v300
    %v333 = vunpack.c.l.b16 %v301
    %v334 = vunpack.c.l.b16 %v302
    %v335 = vunpack.c.l.b16 %v303
    %v336 = vunpack.c.l.b16 %v304
    %v337 = vunpack.c.l.b16 %v305
    %v338 = vpack.c.b16 %v323, %v322
    %v339 = vpack.c.b16 %v325, %v324
    %v340 = vpack.c.b16 %v327, %v326
    %v341 = vpack.c.b16 %v329, %v328
    %v342 = vpack.c.b16 %v331, %v330
    %v343 = vpack.c.b16 %v333, %v332
    %v344 = vpack.c.b16 %v335, %v334
    %v345 = vpack.c.b16 %v337, %v336
    %354 = vmatpush.bf16.msra.mxu0 %v345
    %355 = vmatpush.bf16.msra.mxu0 %v344
    %356 = vmatpush.bf16.msra.mxu0 %v343
    %357 = vmatpush.bf16.msra.mxu0 %v342
    %358 = vmatpush.bf16.msra.mxu0 %v341
    %359 = vmatpush.bf16.msra.mxu0 %v340
    %360 = vmatpush.bf16.msra.mxu0 %v339
    %361 = vmatpush.bf16.msra.mxu0 %v338
    %362 = vmatmul.bf16.gmra.mxu0 %v288
    %v363 = vpop.f32.mrf.mxu0
    %v364 = vadd.f32 0.0, %v363
    %v365 = vpop.f32.mrf.mxu0
    %366 = vdwg.mxu0
    %v367 = vmax.f32 %v364, 0.0
    %v368 = vpack.c.bf16 %v367, %v367
    %s369 = scalar_lea.vmem [#allocation6], 256
    %v370 = vld [vmem:[%s369] sm:$0xf]
    %v371 = vld [vmem:[%s369 + $0x4] sm:$0xf]
    %v372 = vld [vmem:[%s369 + $0x8] sm:$0xf]
    %v373 = vld [vmem:[%s369 + $0xc] sm:$0xf]
    %v374 = vld [vmem:[%s369 + $0x10] sm:$0xf]
    %v375 = vld [vmem:[%s369 + $0x14] sm:$0xf]
    %v376 = vld [vmem:[%s369 + $0x18] sm:$0xf]
    %v377 = vld [vmem:[%s369 + $0x1c] sm:$0xf]
    %v378 = vld [vmem:[%s369 + $0x20] sm:$0xf]
    %v379 = vld [vmem:[%s369 + $0x24] sm:$0xf]
    %v380 = vld [vmem:[%s369 + $0x28] sm:$0xf]
    %v381 = vld [vmem:[%s369 + $0x2c] sm:$0xf]
    %v382 = vld [vmem:[%s369 + $0x30] sm:$0xf]
    %v383 = vld [vmem:[%s369 + $0x34] sm:$0xf]
    %v384 = vld [vmem:[%s369 + $0x38] sm:$0xf]
    %v385 = vld [vmem:[%s369 + $0x3c] sm:$0xf]
    %v402 = vunpack.c.l.b16 %v370
    %v403 = vunpack.c.l.b16 %v371
    %v404 = vunpack.c.l.b16 %v372
    %v405 = vunpack.c.l.b16 %v373
    %v406 = vunpack.c.l.b16 %v374
    %v407 = vunpack.c.l.b16 %v375
    %v408 = vunpack.c.l.b16 %v376
    %v409 = vunpack.c.l.b16 %v377
    %v410 = vunpack.c.l.b16 %v378
    %v411 = vunpack.c.l.b16 %v379
    %v412 = vunpack.c.l.b16 %v380
    %v413 = vunpack.c.l.b16 %v381
    %v414 = vunpack.c.l.b16 %v382
    %v415 = vunpack.c.l.b16 %v383
    %v416 = vunpack.c.l.b16 %v384
    %v417 = vunpack.c.l.b16 %v385
    %v418 = vpack.c.b16 %v403, %v402
    %v419 = vpack.c.b16 %v405, %v404
    %v420 = vpack.c.b16 %v407, %v406
    %v421 = vpack.c.b16 %v409, %v408
    %v422 = vpack.c.b16 %v411, %v410
    %v423 = vpack.c.b16 %v413, %v412
    %v424 = vpack.c.b16 %v415, %v414
    %v425 = vpack.c.b16 %v417, %v416
    %434 = vmatpush.bf16.msra.mxu0 %v425
    %435 = vmatpush.bf16.msra.mxu0 %v424
    %436 = vmatpush.bf16.msra.mxu0 %v423
    %437 = vmatpush.bf16.msra.mxu0 %v422
    %438 = vmatpush.bf16.msra.mxu0 %v421
    %439 = vmatpush.bf16.msra.mxu0 %v420
    %440 = vmatpush.bf16.msra.mxu0 %v419
    %441 = vmatpush.bf16.msra.mxu0 %v418
    %442 = vmatmul.bf16.gmra.mxu0 %v368
    %v443 = vpop.f32.mrf.mxu0
    %v444 = vadd.f32 0.0, %v443
    %v445 = vpop.f32.mrf.mxu0
    %446 = vdwg.mxu0
    %447 = vst [vmem:[#allocation8] sm:$0xff] %v444
    // Predicated region
    $region18: #{tpu_custom_call.1} parent=1 // pred_check
      _
    $region19: #{tpu_custom_call.1} parent=1 // pred_check_branch
      %449 = sbr.rel (0) target = $region21
    $region20: #{tpu_custom_call.1} parent=1 // pred_region
      %451 = vsyncadd [#allocation5], 0
      %s453 = sshll.u32 [#allocation8], 4
      %s454 = int_to_ptr.vmem [resolvable:$true] %s453
      %s455 = sshll.u32 %s2, 4
      %s456 = int_to_ptr.hbm [resolvable:$true] %s455
      %458 = dma.vmem_to_hbm [thread:$0]  %s454, 128, %s456, [#allocation5]
    $region21: #{tpu_custom_call.1} parent=1 // pred_fallthru
      _
    // Predicated region
    $region22: #{tpu_custom_call.1} parent=1 // pred_check
      _
    $region23: #{tpu_custom_call.1} parent=1 // pred_check_branch
      %460 = sbr.rel (0) target = $region25
    $region24: #{tpu_custom_call.1} parent=1 // pred_region
      %462 = dma.done [#allocation5], 128
    $region25: #{tpu_custom_call.1} parent=1 // pred_fallthru
      _
    %463 = vsyncpa [#allocation4], 1
    %464 = vsyncpa [#allocation7], 1
    %465 = vsyncpa [#allocation5], 1

</llo_original>
